<compile_context>
chip_gen: v7x
topology: tpu7x:2x2x1
jax: 0.10.0
libtpu: 0.0.40
codegen_flags: <defaults>
</compile_context>

<pallas_src>
import functools

import numpy as np
import jax
import jax.numpy as jnp
from jax.experimental import pallas as pl
from jax.experimental.pallas import tpu as pltpu


# ---------------------------------------------------------------------------
# Host-side helpers: weights, output-size semantics, planning
# ---------------------------------------------------------------------------
def _round_up(x: int, m: int) -> int:
    return ((x + m - 1) // m) * m


def _bilinear_weights(in_size: int, out_size: int, antialias: bool = True) -> np.ndarray:
    """(out_size, in_size) row-stochastic triangle-filter weights.

    Matches PIL / torchvision antialiased bilinear resize (and plain bilinear
    with align_corners=False when upscaling, where antialias is a no-op).
    """
    scale = in_size / out_size
    filterscale = scale if (antialias and scale > 1.0) else 1.0
    i = np.arange(out_size, dtype=np.float64)[:, None]
    x = np.arange(in_size, dtype=np.float64)[None, :]
    center = (i + 0.5) * scale
    w = np.maximum(0.0, 1.0 - np.abs(x + 0.5 - center) / filterscale)
    w = w / np.maximum(w.sum(axis=1, keepdims=True), 1e-12)
    return w.astype(np.float32)


def _compute_output_size(h: int, w: int, size, max_size=None):
    """torchvision.transforms.functional.resize output-size semantics."""
    if isinstance(size, int):
        size = [size]
    size = list(size)
    if len(size) == 2:
        return int(size[0]), int(size[1])
    requested = int(size[0])
    short, long = (w, h) if w <= h else (h, w)
    new_short, new_long = requested, int(requested * long / short)
    if max_size is not None and new_long > max_size:
        new_short, new_long = int(max_size * new_short / new_long), int(max_size)
    new_w, new_h = (new_short, new_long) if w <= h else (new_long, new_short)
    return new_h, new_w


def _vmem_limit_bytes() -> int:
    """Generation-aware VMEM limit: ~75% of the chip's per-core VMEM."""
    try:
        cap = int(pltpu.get_tpu_info().vmem_capacity_bytes)
    except Exception:  # pragma: no cover - conservative (v7x per-core) fallback
        cap = 64 * 1024 * 1024
    return (cap * 3) // 4


def _pick_tile_h(hout: int, align: int) -> int:
    if hout <= 256:
        return max(align, _round_up(hout, align))
    # Prefer an exact divisor of Hout so the wrapper's H crop is an identity slice.
    for d in range(256, align - 1, -align):
        if hout % d == 0:
            return d
    return 256 if (_round_up(hout, 256) - hout) <= max(hout // 8, 8) else 128


def _estimate_vmem(tile_h, band_h, win, wout_pad, x_isize, c_isize, o_isize):
    return (2 * band_h * win * x_isize           # manual double-buffered input band
            + 2 * tile_h * band_h * c_isize      # wh block (auto double-buffered)
            + 1 * win * wout_pad * c_isize       # wwt (single-buffered)
            + 2 * tile_h * wout_pad * o_isize    # output block (double-buffered)
            + tile_h * win * 4                   # H-pass f32 intermediate
            + tile_h * wout_pad * 4)             # W-pass f32 intermediate


@functools.lru_cache(maxsize=128)
def _build_plan(hin, win, hout, wout, antialias, x_dtype, compute_dtype, tile_h_req):
    """Per-shape resize plan: banded weights, band starts, tile sizes (cached)."""
    x_np = np.dtype(x_dtype)
    c_np = np.dtype(compute_dtype)
    align = {1: 32, 2: 16}.get(x_np.itemsize, 8)   # output sublane packing
    wout_pad = _round_up(wout, 128)                # lane-dense output stores
    vmem_limit = _vmem_limit_bytes()

    wh = _bilinear_weights(hin, hout, antialias)   # (hout, hin)
    ww = _bilinear_weights(win, wout, antialias)   # (wout, win)

    def banding(tile_h):
        hout_pad = _round_up(hout, tile_h)
        n_tiles = hout_pad // tile_h
        wh_pad = np.zeros((hout_pad, hin), np.float32)
        wh_pad[:hout] = wh
        lo, hi = [], []
        for t in range(n_tiles):
            cols = np.flatnonzero(wh_pad[t * tile_h:(t + 1) * tile_h].sum(axis=0) > 0)
            lo.append(int(cols[0]) if cols.size else 0)
            hi.append(int(cols[-1]) if cols.size else 0)
        max_span = max(b - a + 1 for a, b in zip(lo, hi))
        band_h = min(hin, _round_up(max_span + 7, 8))  # +7: room to 8-align starts
        starts = np.clip((np.asarray(lo, np.int64) // 8) * 8,
                         0, hin - band_h).astype(np.int32)
        wh_banded = np.zeros((n_tiles, tile_h, band_h), np.float32)
        for t in range(n_tiles):
            s = int(starts[t])
            wh_banded[t] = wh_pad[t * tile_h:(t + 1) * tile_h, s:s + band_h]
        return hout_pad, n_tiles, band_h, starts, wh_banded

    if tile_h_req is not None:
        tile_h = max(align, _round_up(int(tile_h_req), align))
    else:
        tile_h = _pick_tile_h(hout, align)

    hout_pad, n_tiles, band_h, starts, wh_banded = banding(tile_h)
    # Host-side VMEM budget guard: shrink tile_h before Mosaic hits the limit.
    while (tile_h > align and
           _estimate_vmem(tile_h, band_h, win, wout_pad, x_np.itemsize,
                          c_np.itemsize, x_np.itemsize) > 0.7 * vmem_limit):
        tile_h = max(align, _round_up(tile_h // 2, align))
        hout_pad, n_tiles, band_h, starts, wh_banded = banding(tile_h)

    wwt = np.zeros((win, wout_pad), np.float32)
    wwt[:, :wout] = ww.T

    return (jnp.asarray(starts),
            jnp.asarray(wh_banded, dtype=c_np),
            jnp.asarray(wwt, dtype=c_np),
            tile_h, band_h, hout_pad, wout_pad, n_tiles, vmem_limit)


# ---------------------------------------------------------------------------
# Pallas kernel: one (tile_h, Wout_pad) output tile of one image per grid step
# ---------------------------------------------------------------------------
def _resize_kernel(band_start_ref,      # SMEM (num_h_tiles,) int32 [scalar prefetch]
                   x_hbm,               # ANY  (N, Hin, Win)        [manual DMA]
                   wh_ref,              # VMEM (tile_h, band_h)     compute dtype
                   wwt_ref,             # VMEM (Win, Wout_pad)      compute dtype
                   o_ref,               # VMEM (tile_h, Wout_pad)   output dtype
                   xband_ref,           # VMEM (2, band_h, Win)     x dtype (scratch)
                   copy_sem,            # DMA semaphores (2,)
                   *, band_h):
    n = pl.program_id(0)
    h = pl.program_id(1)
    nh = pl.num_programs(1)
    slot = h % 2

    def band_copy(dst_slot, src_h):
        start = band_start_ref[src_h]
        return pltpu.make_async_copy(
            x_hbm.at[n, pl.ds(start, band_h), :],
            xband_ref.at[dst_slot],
            copy_sem.at[dst_slot])

    # Prime this image's first band.  Each n is self-contained, so the N grid
    # axis can be megacore-sharded ("parallel") without breaking the chain.
    @pl.when(h == 0)
    def _():
        band_copy(slot, h).start()

    # Prefetch the next h-tile's band into the other buffer (overlap with compute).
    @pl.when(h + 1 < nh)
    def _():
        band_copy(1 - slot, h + 1).start()

    band_copy(slot, h).wait()

    # Only the band is cast (no per-tile full-image cast anymore).
    x = xband_ref[slot].astype(wh_ref.dtype)                               # (band_h, Win)
    # H-pass on the MXU with banded K, f32 accumulation.
    tmp = jnp.dot(wh_ref[...], x, preferred_element_type=jnp.float32)      # (tile_h, Win)
    # W-pass on the MXU (weights pre-transposed on host).
    out = jnp.dot(tmp.astype(wwt_ref.dtype), wwt_ref[...],
                  preferred_element_type=jnp.float32)                      # (tile_h, Wout_pad)

    if jnp.issubdtype(o_ref.dtype, jnp.integer):
        info = jnp.iinfo(o_ref.dtype)
        out = jnp.clip(jnp.round(out), info.min, info.max)
    o_ref[...] = out.astype(o_ref.dtype)


def resize(x: jax.Array, size, *, max_size=None, antialias: bool = True,
           compute_dtype=jnp.bfloat16, tile_h: int | None = None) -> jax.Array:
    """Bilinear resize of an NCHW tensor, matching torchvision Resize.

    compute_dtype=jnp.float32 gives an f32-MXU path for validation (slower);
    the bf16 default accumulates in f32 on the MXU.
    """
    B, C, Hin, Win = x.shape
    Hout, Wout = _compute_output_size(Hin, Win, size, max_size)
    N = B * C

    (band_start, wh_banded, wwt, tile_h, band_h, Hout_pad, Wout_pad,
     num_h_tiles, vmem_limit) = _build_plan(
        int(Hin), int(Win), int(Hout), int(Wout), bool(antialias),
        np.dtype(x.dtype), np.dtype(compute_dtype),
        None if tile_h is None else int(tile_h))

    x_flat = x.reshape(N, Hin, Win)                 # no dtype cast in the wrapper
    isz = np.dtype(x.dtype).itemsize
    cost = pl.CostEstimate(
        flops=2 * N * num_h_tiles * tile_h * (band_h * Win + Win * Wout_pad),
        transcendentals=0,
        bytes_accessed=(N * num_h_tiles * band_h * Win * isz
                        + N * Hout_pad * Wout_pad * isz
                        + int(wh_banded.size) * 2 + int(wwt.size) * 2),
    )

    def run(wwt_spec):
        grid_spec = pltpu.PrefetchScalarGridSpec(
            num_scalar_prefetch=1,
            grid=(N, num_h_tiles),
            in_specs=[
                # x stays in HBM; only the needed band is DMA'd per h-tile.
                pl.BlockSpec(memory_space=pl.ANY),
                pl.BlockSpec((None, tile_h, band_h), lambda n, h, bs: (h, 0, 0)),
                wwt_spec,
            ],
            out_specs=pl.BlockSpec((None, tile_h, Wout_pad),
                                   lambda n, h, bs: (n, h, 0)),
            scratch_shapes=[
                pltpu.VMEM((2, band_h, Win), x.dtype),     # band double-buffer
                pltpu.SemaphoreType.DMA((2,)),
            ],
        )
        return pl.pallas_call(
            functools.partial(_resize_kernel, band_h=band_h),
            out_shape=jax.ShapeDtypeStruct((N, Hout_pad, Wout_pad), x.dtype),
            grid_spec=grid_spec,
            compiler_params=pltpu.CompilerParams(
                # h must stay sequential per core (band prefetch chain / no
                # re-DMA on v7x megacore); N provides the parallel work.
                dimension_semantics=("parallel", "arbitrary"),
                vmem_limit_bytes=int(vmem_limit)),
            cost_estimate=cost,
        )(band_start, x_flat, wh_banded, wwt)

    wwt_block = (Win, Wout_pad)
    wwt_map = lambda n, h, bs: (0, 0)
    default_spec = pl.BlockSpec(wwt_block, wwt_map)
    try:
        # wwt's block index is constant across the grid -> single-buffer it.
        single_buf_spec = pl.BlockSpec(wwt_block, wwt_map,
                                       pipeline_mode=pl.Buffered(1))
    except Exception:
        single_buf_spec = None

    if single_buf_spec is not None:
        try:
            out_flat = run(single_buf_spec)
        except Exception:
            out_flat = run(default_spec)   # version-robust fallback
    else:
        out_flat = run(default_spec)

    # Crop lane/tile padding (identity when tile_h divides Hout and Wout%128==0).
    return out_flat[:, :Hout, :Wout].reshape(B, C, Hout, Wout)


class Resize:
    """Minimal JAX/Pallas port of the torchvision-style Resize transform.

    Only tensor (NCHW) image inputs are handled; the pytree / PIL dispatch of
    the original Transform base class is host-side plumbing with no Pallas
    equivalent.
    """

    def __init__(self, size, interpolation="bilinear", max_size=None, antialias=True):
        if isinstance(size, int):
            size = [size]
        elif isinstance(size, (list, tuple)) and len(size) in {1, 2}:
            size = list(size)
        else:
            raise ValueError(
                "size can either be an integer or a sequence of one or two "
                f"integers, but got {size} instead.")
        if "bilinear" not in str(interpolation).lower():
            # TODO(synk): NEAREST / BICUBIC interpolation modes are not implemented.
            raise NotImplementedError("Only bilinear interpolation is supported.")
        self.size = size
        self.max_size = max_size
        self.antialias = antialias

    def __call__(self, x: jax.Array) -> jax.Array:
        return resize(x, self.size, max_size=self.max_size, antialias=self.antialias)


# ---------------------------------------------------------------------------
# Reference (numpy, float64) for correctness checks of the kernel path
# ---------------------------------------------------------------------------
def _resize_ref(x, size, max_size=None, antialias=True):
    xn = np.asarray(x)
    dt = xn.dtype
    xf = xn.astype(np.float64)
    B, C, Hin, Win = xf.shape
    Hout, Wout = _compute_output_size(Hin, Win, size, max_size)
    wh = _bilinear_weights(Hin, Hout, antialias).astype(np.float64)
    ww = _bilinear_weights(Win, Wout, antialias).astype(np.float64)
    out = np.einsum("oh,bchw,pw->bcop", wh, xf, ww)
    if np.issubdtype(dt, np.integer):
        info = np.iinfo(dt)
        out = np.clip(np.round(out), info.min, info.max)
    return out.astype(dt)


if __name__ == "__main__":
    key = jax.random.PRNGKey(0)
    k0, k1, k2 = jax.random.split(key, 3)

    # 1) Explicit (H, W) downscale, f32 (antialias active on both axes).
    x = jax.random.uniform(k0, (2, 4, 16, 16), dtype=jnp.float32)
    y = jax.block_until_ready(Resize(size=(8, 12))(x))
    assert y.shape == (2, 4, 8, 12), y.shape
    # bf16 MXU inputs -> relaxed tolerance vs the f64 reference.
    np.testing.assert_allclose(np.asarray(y), _resize_ref(x, (8, 12)),
                               rtol=2e-2, atol=2e-2)

    # 2) Single-int (shorter-edge) size path.
    y2 = jax.block_until_ready(Resize(size=8)(x))
    assert y2.shape == (2, 4, 8, 8), y2.shape

    # 3) Multi-tile Hout path (exercises banded tiles + double-buffered band DMA).
    x3 = jax.random.uniform(k1, (1, 2, 32, 32), dtype=jnp.float32)
    y3 = jax.block_until_ready(resize(x3, (24, 20), tile_h=8))
    assert y3.shape == (1, 2, 24, 20), y3.shape
    np.testing.assert_allclose(np.asarray(y3), _resize_ref(x3, (24, 20)),
                               rtol=2e-2, atol=2e-2)

    # 4) Upscale path (antialias is a no-op when scale < 1).
    y4 = jax.block_until_ready(resize(x3, (40, 48)))
    assert y4.shape == (1, 2, 40, 48), y4.shape
    np.testing.assert_allclose(np.asarray(y4), _resize_ref(x3, (40, 48)),
                               rtol=2e-2, atol=2e-2)

    # 5) uint8 image path (round + clamp before the integer store).
    x5 = (jax.random.uniform(k2, (2, 3, 16, 16)) * 255).astype(jnp.uint8)
    y5 = jax.block_until_ready(Resize(size=(8, 12))(x5))
    assert y5.shape == (2, 3, 8, 12) and y5.dtype == jnp.uint8, (y5.shape, y5.dtype)
    diff = np.abs(np.asarray(y5).astype(np.int32)
                  - _resize_ref(x5, (8, 12)).astype(np.int32))
    assert diff.max() <= 6, diff.max()

    print("KERNEL_OK")
</pallas_src>

<mosaic_0001>
module attributes {stable_mosaic.version = 11 : i64} {
  func.func @_resize_kernel(%arg0: i32, %arg1: i32, %arg2: memref<1xi32, #tpu.memory_space<smem>>, %arg3: memref<8x16x16xf32, #tpu.memory_space<any>>, %arg4: memref<1x8x16xbf16, #tpu.memory_space<vmem>>, %arg5: memref<16x128xbf16, #tpu.memory_space<vmem>>, %arg6: memref<1x8x128xf32, #tpu.memory_space<vmem>>, %arg7: memref<2x16x16xf32, #tpu.memory_space<vmem>>, %arg8: memref<2x!tpu.dma_semaphore, #tpu.memory_space<semaphore_mem>>) attributes {dimension_semantics = [#tpu.dimension_semantics<parallel>, #tpu.dimension_semantics<arbitrary>], iteration_bounds = array<i64: 8, 1>, scalar_prefetch = 1 : i64, scratch_operands = 2 : i64, tpu.core_type = #tpu.core_type<tc>, window_params = [{}, {transform_indices = @transform_1, window_bounds = array<i64: 1, 8, 16>}, {pipeline_mode = #tpu.pipeline_mode<synchronous>, transform_indices = @transform_2, window_bounds = array<i64: 16, 128>}, {transform_indices = @transform_3, window_bounds = array<i64: 1, 8, 128>}]} {
    %c2_i32 = arith.constant 2 : i32
    %c0_i32 = arith.constant 0 : i32
    %0 = arith.cmpi eq, %c2_i32, %c0_i32 : i32
    %c1_i32 = arith.constant 1 : i32
    %1 = arith.select %0, %c1_i32, %c2_i32 : i32
    %2 = arith.remsi %arg1, %1 : i32
    %c0_i32_0 = arith.constant 0 : i32
    %3 = arith.cmpi ne, %2, %c0_i32_0 : i32
    %c0_i32_1 = arith.constant 0 : i32
    %4 = arith.cmpi slt, %2, %c0_i32_1 : i32
    %c0_i32_2 = arith.constant 0 : i32
    %5 = arith.cmpi slt, %1, %c0_i32_2 : i32
    %6 = arith.xori %4, %5 : i1
    %7 = arith.andi %6, %3 : i1
    %8 = arith.addi %2, %1 : i32
    %9 = arith.select %7, %8, %2 : i32
    %c0_i32_3 = arith.constant 0 : i32
    %10 = arith.cmpi eq, %arg1, %c0_i32_3 : i32
    %11 = arith.extui %10 : i1 to i32
    %c0_i32_4 = arith.constant 0 : i32
    %12 = arith.cmpi ne, %11, %c0_i32_4 : i32
    scf.if %12 {
      %38 = arith.index_cast %arg1 : i32 to index
      %39 = memref.load %arg2[%38] : memref<1xi32, #tpu.memory_space<smem>>
      %c0_i32_21 = arith.constant 0 : i32
      %40 = tpu.memref_slice %arg3[%arg0, %39, %c0_i32_21] : memref<8x16x16xf32, #tpu.memory_space<any>> -> memref<1x16x16xf32, #tpu.memory_space<any>>
      %41 = tpu.memref_squeeze %40 : memref<1x16x16xf32, #tpu.memory_space<any>> -> memref<16x16xf32, #tpu.memory_space<any>>
      %c0_i32_22 = arith.constant 0 : i32
      %c0_i32_23 = arith.constant 0 : i32
      %42 = tpu.memref_slice %arg7[%9, %c0_i32_22, %c0_i32_23] : memref<2x16x16xf32, #tpu.memory_space<vmem>> -> memref<1x16x16xf32, #tpu.memory_space<vmem>>
      %43 = tpu.memref_squeeze %42 : memref<1x16x16xf32, #tpu.memory_space<vmem>> -> memref<16x16xf32, #tpu.memory_space<vmem>>
      %44 = tpu.memref_slice %arg8[%9] : memref<2x!tpu.dma_semaphore, #tpu.memory_space<semaphore_mem>> -> memref<1x!tpu.dma_semaphore, #tpu.memory_space<semaphore_mem>>
      %45 = tpu.memref_squeeze %44 : memref<1x!tpu.dma_semaphore, #tpu.memory_space<semaphore_mem>> -> memref<!tpu.dma_semaphore, #tpu.memory_space<semaphore_mem>>
      tpu.enqueue_dma source(%41 : memref<16x16xf32, #tpu.memory_space<any>>) target(%43 : memref<16x16xf32, #tpu.memory_space<vmem>>) target_semaphore(%45 : memref<!tpu.dma_semaphore, #tpu.memory_space<semaphore_mem>>)
    } else {
    }
    %c1_i32_5 = arith.constant 1 : i32
    %13 = arith.addi %arg1, %c1_i32_5 : i32
    %c1_i32_6 = arith.constant 1 : i32
    %14 = arith.cmpi slt, %13, %c1_i32_6 : i32
    %15 = arith.extui %14 : i1 to i32
    %c0_i32_7 = arith.constant 0 : i32
    %16 = arith.cmpi ne, %15, %c0_i32_7 : i32
    scf.if %16 {
      %c1_i32_21 = arith.constant 1 : i32
      %38 = arith.subi %c1_i32_21, %9 : i32
      %c1_i32_22 = arith.constant 1 : i32
      %39 = arith.addi %arg1, %c1_i32_22 : i32
      %40 = arith.index_cast %39 : i32 to index
      %41 = memref.load %arg2[%40] : memref<1xi32, #tpu.memory_space<smem>>
      %c0_i32_23 = arith.constant 0 : i32
      %42 = tpu.memref_slice %arg3[%arg0, %41, %c0_i32_23] : memref<8x16x16xf32, #tpu.memory_space<any>> -> memref<1x16x16xf32, #tpu.memory_space<any>>
      %43 = tpu.memref_squeeze %42 : memref<1x16x16xf32, #tpu.memory_space<any>> -> memref<16x16xf32, #tpu.memory_space<any>>
      %c0_i32_24 = arith.constant 0 : i32
      %c0_i32_25 = arith.constant 0 : i32
      %44 = tpu.memref_slice %arg7[%38, %c0_i32_24, %c0_i32_25] : memref<2x16x16xf32, #tpu.memory_space<vmem>> -> memref<1x16x16xf32, #tpu.memory_space<vmem>>
      %45 = tpu.memref_squeeze %44 : memref<1x16x16xf32, #tpu.memory_space<vmem>> -> memref<16x16xf32, #tpu.memory_space<vmem>>
      %46 = tpu.memref_slice %arg8[%38] : memref<2x!tpu.dma_semaphore, #tpu.memory_space<semaphore_mem>> -> memref<1x!tpu.dma_semaphore, #tpu.memory_space<semaphore_mem>>
      %47 = tpu.memref_squeeze %46 : memref<1x!tpu.dma_semaphore, #tpu.memory_space<semaphore_mem>> -> memref<!tpu.dma_semaphore, #tpu.memory_space<semaphore_mem>>
      tpu.enqueue_dma source(%43 : memref<16x16xf32, #tpu.memory_space<any>>) target(%45 : memref<16x16xf32, #tpu.memory_space<vmem>>) target_semaphore(%47 : memref<!tpu.dma_semaphore, #tpu.memory_space<semaphore_mem>>)
    } else {
    }
    %17 = arith.index_cast %arg1 : i32 to index
    %18 = memref.load %arg2[%17] : memref<1xi32, #tpu.memory_space<smem>>
    %c0_i32_8 = arith.constant 0 : i32
    %19 = tpu.memref_slice %arg3[%arg0, %18, %c0_i32_8] : memref<8x16x16xf32, #tpu.memory_space<any>> -> memref<1x16x16xf32, #tpu.memory_space<any>>
    %20 = tpu.memref_squeeze %19 : memref<1x16x16xf32, #tpu.memory_space<any>> -> memref<16x16xf32, #tpu.memory_space<any>>
    %c0_i32_9 = arith.constant 0 : i32
    %c0_i32_10 = arith.constant 0 : i32
    %21 = tpu.memref_slice %arg7[%9, %c0_i32_9, %c0_i32_10] : memref<2x16x16xf32, #tpu.memory_space<vmem>> -> memref<1x16x16xf32, #tpu.memory_space<vmem>>
    %22 = tpu.memref_squeeze %21 : memref<1x16x16xf32, #tpu.memory_space<vmem>> -> memref<16x16xf32, #tpu.memory_space<vmem>>
    %23 = tpu.memref_slice %arg8[%9] : memref<2x!tpu.dma_semaphore, #tpu.memory_space<semaphore_mem>> -> memref<1x!tpu.dma_semaphore, #tpu.memory_space<semaphore_mem>>
    %24 = tpu.memref_squeeze %23 : memref<1x!tpu.dma_semaphore, #tpu.memory_space<semaphore_mem>> -> memref<!tpu.dma_semaphore, #tpu.memory_space<semaphore_mem>>
    tpu.wait_dma2 semaphore(%24 : memref<!tpu.dma_semaphore, #tpu.memory_space<semaphore_mem>>) src(%20 : memref<16x16xf32, #tpu.memory_space<any>>) dst(%22 : memref<16x16xf32, #tpu.memory_space<vmem>>)
    %25 = arith.index_cast %9 : i32 to index
    %c0 = arith.constant 0 : index
    %c0_11 = arith.constant 0 : index
    %26 = vector.load %arg7[%25, %c0, %c0_11] : memref<2x16x16xf32, #tpu.memory_space<vmem>>, vector<1x16x16xf32>
    %27 = vector.shape_cast %26 : vector<1x16x16xf32> to vector<16x16xf32>
    %28 = arith.truncf %27 : vector<16x16xf32> to vector<16x16xbf16>
    %c0_12 = arith.constant 0 : index
    %c0_13 = arith.constant 0 : index
    %c0_14 = arith.constant 0 : index
    %29 = vector.load %arg4[%c0_12, %c0_13, %c0_14] : memref<1x8x16xbf16, #tpu.memory_space<vmem>>, vector<1x8x16xbf16>
    %30 = vector.shape_cast %29 : vector<1x8x16xbf16> to vector<8x16xbf16>
    %cst = arith.constant dense<0.000000e+00> : vector<8x16xf32>
    %31 = tpu.matmul %30, %28, %cst {dimension_numbers = #tpu.dot_dimension_numbers<[1], [0], [0], [1], [0, 0, 1, 1], [], []>} : vector<8x16xbf16>, vector<16x16xbf16>, vector<8x16xf32> -> vector<8x16xf32>
    %32 = arith.truncf %31 : vector<8x16xf32> to vector<8x16xbf16>
    %c0_15 = arith.constant 0 : index
    %c0_16 = arith.constant 0 : index
    %33 = vector.load %arg5[%c0_15, %c0_16] : memref<16x128xbf16, #tpu.memory_space<vmem>>, vector<16x128xbf16>
    %cst_17 = arith.constant dense<0.000000e+00> : vector<8x128xf32>
    %34 = tpu.matmul %32, %33, %cst_17 {dimension_numbers = #tpu.dot_dimension_numbers<[1], [0], [0], [1], [0, 0, 1, 1], [], []>} : vector<8x16xbf16>, vector<16x128xbf16>, vector<8x128xf32> -> vector<8x128xf32>
    %c0_18 = arith.constant 0 : index
    %c0_19 = arith.constant 0 : index
    %c0_20 = arith.constant 0 : index
    %35 = vector.load %arg6[%c0_18, %c0_19, %c0_20] : memref<1x8x128xf32, #tpu.memory_space<vmem>>, vector<1x8x128xf32>
    %36 = vector.shape_cast %35 : vector<1x8x128xf32> to vector<8x128xf32>
    %37 = vector.shape_cast %34 : vector<8x128xf32> to vector<1x8x128xf32>
    tpu.vector_store %arg6[%c0_18, %c0_19, %c0_20], %37 {strides = array<i32>} : memref<1x8x128xf32, #tpu.memory_space<vmem>>, vector<1x8x128xf32>,
    return
  }
  func.func @transform_1(%arg0: i32, %arg1: i32, %arg2: memref<1xi32, #tpu.memory_space<smem>>) -> (i32, i32, i32) {
    %c0_i32 = arith.constant 0 : i32
    %c0_i32_0 = arith.constant 0 : i32
    %c0_i32_1 = arith.constant 0 : i32
    return %arg1, %c0_i32, %c0_i32_0 : i32, i32, i32
  }
  func.func @transform_2(%arg0: i32, %arg1: i32, %arg2: memref<1xi32, #tpu.memory_space<smem>>) -> (i32, i32) {
    %c0_i32 = arith.constant 0 : i32
    %c0_i32_0 = arith.constant 0 : i32
    %c0_i32_1 = arith.constant 0 : i32
    return %c0_i32, %c0_i32_0 : i32, i32
  }
  func.func @transform_3(%arg0: i32, %arg1: i32, %arg2: memref<1xi32, #tpu.memory_space<smem>>) -> (i32, i32, i32) {
    %c0_i32 = arith.constant 0 : i32
    %c0_i32_0 = arith.constant 0 : i32
    return %arg0, %arg1, %c0_i32 : i32, i32, i32
  }
}

module attributes {stable_mosaic.version = 11 : i64} {
  func.func @_resize_kernel(%arg0: i32, %arg1: i32, %arg2: memref<1xi32, #tpu.memory_space<smem>>, %arg3: memref<8x16x16xf32, #tpu.memory_space<any>>, %arg4: memref<1x8x16xbf16, #tpu.memory_space<vmem>>, %arg5: memref<16x128xbf16, #tpu.memory_space<vmem>>, %arg6: memref<1x8x128xf32, #tpu.memory_space<vmem>>, %arg7: memref<2x16x16xf32, #tpu.memory_space<vmem>>, %arg8: memref<2x!tpu.dma_semaphore, #tpu.memory_space<semaphore_mem>>) attributes {dimension_semantics = [#tpu.dimension_semantics<parallel>, #tpu.dimension_semantics<arbitrary>], iteration_bounds = array<i64: 8, 1>, scalar_prefetch = 1 : i64, scratch_operands = 2 : i64, tpu.core_type = #tpu.core_type<tc>, window_params = [{}, {transform_indices = @transform_1, window_bounds = array<i64: 1, 8, 16>}, {pipeline_mode = #tpu.pipeline_mode<synchronous>, transform_indices = @transform_2, window_bounds = array<i64: 16, 128>}, {transform_indices = @transform_3, window_bounds = array<i64: 1, 8, 128>}]} {
    %c2_i32 = arith.constant 2 : i32
    %c0_i32 = arith.constant 0 : i32
    %0 = arith.cmpi eq, %c2_i32, %c0_i32 : i32
    %c1_i32 = arith.constant 1 : i32
    %1 = arith.select %0, %c1_i32, %c2_i32 : i32
    %2 = arith.remsi %arg1, %1 : i32
    %c0_i32_0 = arith.constant 0 : i32
    %3 = arith.cmpi ne, %2, %c0_i32_0 : i32
    %c0_i32_1 = arith.constant 0 : i32
    %4 = arith.cmpi slt, %2, %c0_i32_1 : i32
    %c0_i32_2 = arith.constant 0 : i32
    %5 = arith.cmpi slt, %1, %c0_i32_2 : i32
    %6 = arith.xori %4, %5 : i1
    %7 = arith.andi %6, %3 : i1
    %8 = arith.addi %2, %1 : i32
    %9 = arith.select %7, %8, %2 : i32
    %c0_i32_3 = arith.constant 0 : i32
    %10 = arith.cmpi eq, %arg1, %c0_i32_3 : i32
    %11 = arith.extui %10 : i1 to i32
    %c0_i32_4 = arith.constant 0 : i32
    %12 = arith.cmpi ne, %11, %c0_i32_4 : i32
    scf.if %12 {
      %38 = arith.index_cast %arg1 : i32 to index
      %39 = memref.load %arg2[%38] : memref<1xi32, #tpu.memory_space<smem>>
      %c0_i32_21 = arith.constant 0 : i32
      %40 = tpu.memref_slice %arg3[%arg0, %39, %c0_i32_21] : memref<8x16x16xf32, #tpu.memory_space<any>> -> memref<1x16x16xf32, #tpu.memory_space<any>>
      %41 = tpu.memref_squeeze %40 : memref<1x16x16xf32, #tpu.memory_space<any>> -> memref<16x16xf32, #tpu.memory_space<any>>
      %c0_i32_22 = arith.constant 0 : i32
      %c0_i32_23 = arith.constant 0 : i32
      %42 = tpu.memref_slice %arg7[%9, %c0_i32_22, %c0_i32_23] : memref<2x16x16xf32, #tpu.memory_space<vmem>> -> memref<1x16x16xf32, #tpu.memory_space<vmem>>
      %43 = tpu.memref_squeeze %42 : memref<1x16x16xf32, #tpu.memory_space<vmem>> -> memref<16x16xf32, #tpu.memory_space<vmem>>
      %44 = tpu.memref_slice %arg8[%9] : memref<2x!tpu.dma_semaphore, #tpu.memory_space<semaphore_mem>> -> memref<1x!tpu.dma_semaphore, #tpu.memory_space<semaphore_mem>>
      %45 = tpu.memref_squeeze %44 : memref<1x!tpu.dma_semaphore, #tpu.memory_space<semaphore_mem>> -> memref<!tpu.dma_semaphore, #tpu.memory_space<semaphore_mem>>
      tpu.enqueue_dma source(%41 : memref<16x16xf32, #tpu.memory_space<any>>) target(%43 : memref<16x16xf32, #tpu.memory_space<vmem>>) target_semaphore(%45 : memref<!tpu.dma_semaphore, #tpu.memory_space<semaphore_mem>>)
    } else {
    }
    %c1_i32_5 = arith.constant 1 : i32
    %13 = arith.addi %arg1, %c1_i32_5 : i32
    %c1_i32_6 = arith.constant 1 : i32
    %14 = arith.cmpi slt, %13, %c1_i32_6 : i32
    %15 = arith.extui %14 : i1 to i32
    %c0_i32_7 = arith.constant 0 : i32
    %16 = arith.cmpi ne, %15, %c0_i32_7 : i32
    scf.if %16 {
      %c1_i32_21 = arith.constant 1 : i32
      %38 = arith.subi %c1_i32_21, %9 : i32
      %c1_i32_22 = arith.constant 1 : i32
      %39 = arith.addi %arg1, %c1_i32_22 : i32
      %40 = arith.index_cast %39 : i32 to index
      %41 = memref.load %arg2[%40] : memref<1xi32, #tpu.memory_space<smem>>
      %c0_i32_23 = arith.constant 0 : i32
      %42 = tpu.memref_slice %arg3[%arg0, %41, %c0_i32_23] : memref<8x16x16xf32, #tpu.memory_space<any>> -> memref<1x16x16xf32, #tpu.memory_space<any>>
      %43 = tpu.memref_squeeze %42 : memref<1x16x16xf32, #tpu.memory_space<any>> -> memref<16x16xf32, #tpu.memory_space<any>>
      %c0_i32_24 = arith.constant 0 : i32
      %c0_i32_25 = arith.constant 0 : i32
      %44 = tpu.memref_slice %arg7[%38, %c0_i32_24, %c0_i32_25] : memref<2x16x16xf32, #tpu.memory_space<vmem>> -> memref<1x16x16xf32, #tpu.memory_space<vmem>>
      %45 = tpu.memref_squeeze %44 : memref<1x16x16xf32, #tpu.memory_space<vmem>> -> memref<16x16xf32, #tpu.memory_space<vmem>>
      %46 = tpu.memref_slice %arg8[%38] : memref<2x!tpu.dma_semaphore, #tpu.memory_space<semaphore_mem>> -> memref<1x!tpu.dma_semaphore, #tpu.memory_space<semaphore_mem>>
      %47 = tpu.memref_squeeze %46 : memref<1x!tpu.dma_semaphore, #tpu.memory_space<semaphore_mem>> -> memref<!tpu.dma_semaphore, #tpu.memory_space<semaphore_mem>>
      tpu.enqueue_dma source(%43 : memref<16x16xf32, #tpu.memory_space<any>>) target(%45 : memref<16x16xf32, #tpu.memory_space<vmem>>) target_semaphore(%47 : memref<!tpu.dma_semaphore, #tpu.memory_space<semaphore_mem>>)
    } else {
    }
    %17 = arith.index_cast %arg1 : i32 to index
    %18 = memref.load %arg2[%17] : memref<1xi32, #tpu.memory_space<smem>>
    %c0_i32_8 = arith.constant 0 : i32
    %19 = tpu.memref_slice %arg3[%arg0, %18, %c0_i32_8] : memref<8x16x16xf32, #tpu.memory_space<any>> -> memref<1x16x16xf32, #tpu.memory_space<any>>
    %20 = tpu.memref_squeeze %19 : memref<1x16x16xf32, #tpu.memory_space<any>> -> memref<16x16xf32, #tpu.memory_space<any>>
    %c0_i32_9 = arith.constant 0 : i32
    %c0_i32_10 = arith.constant 0 : i32
    %21 = tpu.memref_slice %arg7[%9, %c0_i32_9, %c0_i32_10] : memref<2x16x16xf32, #tpu.memory_space<vmem>> -> memref<1x16x16xf32, #tpu.memory_space<vmem>>
    %22 = tpu.memref_squeeze %21 : memref<1x16x16xf32, #tpu.memory_space<vmem>> -> memref<16x16xf32, #tpu.memory_space<vmem>>
    %23 = tpu.memref_slice %arg8[%9] : memref<2x!tpu.dma_semaphore, #tpu.memory_space<semaphore_mem>> -> memref<1x!tpu.dma_semaphore, #tpu.memory_space<semaphore_mem>>
    %24 = tpu.memref_squeeze %23 : memref<1x!tpu.dma_semaphore, #tpu.memory_space<semaphore_mem>> -> memref<!tpu.dma_semaphore, #tpu.memory_space<semaphore_mem>>
    tpu.wait_dma2 semaphore(%24 : memref<!tpu.dma_semaphore, #tpu.memory_space<semaphore_mem>>) src(%20 : memref<16x16xf32, #tpu.memory_space<any>>) dst(%22 : memref<16x16xf32, #tpu.memory_space<vmem>>)
    %25 = arith.index_cast %9 : i32 to index
    %c0 = arith.constant 0 : index
    %c0_11 = arith.constant 0 : index
    %26 = vector.load %arg7[%25, %c0, %c0_11] : memref<2x16x16xf32, #tpu.memory_space<vmem>>, vector<1x16x16xf32>
    %27 = vector.shape_cast %26 : vector<1x16x16xf32> to vector<16x16xf32>
    %28 = arith.truncf %27 : vector<16x16xf32> to vector<16x16xbf16>
    %c0_12 = arith.constant 0 : index
    %c0_13 = arith.constant 0 : index
    %c0_14 = arith.constant 0 : index
    %29 = vector.load %arg4[%c0_12, %c0_13, %c0_14] : memref<1x8x16xbf16, #tpu.memory_space<vmem>>, vector<1x8x16xbf16>
    %30 = vector.shape_cast %29 : vector<1x8x16xbf16> to vector<8x16xbf16>
    %cst = arith.constant dense<0.000000e+00> : vector<8x16xf32>
    %31 = tpu.matmul %30, %28, %cst {dimension_numbers = #tpu.dot_dimension_numbers<[1], [0], [0], [1], [0, 0, 1, 1], [], []>} : vector<8x16xbf16>, vector<16x16xbf16>, vector<8x16xf32> -> vector<8x16xf32>
    %32 = arith.truncf %31 : vector<8x16xf32> to vector<8x16xbf16>
    %c0_15 = arith.constant 0 : index
    %c0_16 = arith.constant 0 : index
    %33 = vector.load %arg5[%c0_15, %c0_16] : memref<16x128xbf16, #tpu.memory_space<vmem>>, vector<16x128xbf16>
    %cst_17 = arith.constant dense<0.000000e+00> : vector<8x128xf32>
    %34 = tpu.matmul %32, %33, %cst_17 {dimension_numbers = #tpu.dot_dimension_numbers<[1], [0], [0], [1], [0, 0, 1, 1], [], []>} : vector<8x16xbf16>, vector<16x128xbf16>, vector<8x128xf32> -> vector<8x128xf32>
    %c0_18 = arith.constant 0 : index
    %c0_19 = arith.constant 0 : index
    %c0_20 = arith.constant 0 : index
    %35 = vector.load %arg6[%c0_18, %c0_19, %c0_20] : memref<1x8x128xf32, #tpu.memory_space<vmem>>, vector<1x8x128xf32>
    %36 = vector.shape_cast %35 : vector<1x8x128xf32> to vector<8x128xf32>
    %37 = vector.shape_cast %34 : vector<8x128xf32> to vector<1x8x128xf32>
    tpu.vector_store %arg6[%c0_18, %c0_19, %c0_20], %37 {strides = array<i32>} : memref<1x8x128xf32, #tpu.memory_space<vmem>>, vector<1x8x128xf32>,
    return
  }
  func.func @transform_1(%arg0: i32, %arg1: i32, %arg2: memref<1xi32, #tpu.memory_space<smem>>) -> (i32, i32, i32) {
    %c0_i32 = arith.constant 0 : i32
    %c0_i32_0 = arith.constant 0 : i32
    %c0_i32_1 = arith.constant 0 : i32
    return %arg1, %c0_i32, %c0_i32_0 : i32, i32, i32
  }
  func.func @transform_2(%arg0: i32, %arg1: i32, %arg2: memref<1xi32, #tpu.memory_space<smem>>) -> (i32, i32) {
    %c0_i32 = arith.constant 0 : i32
    %c0_i32_0 = arith.constant 0 : i32
    %c0_i32_1 = arith.constant 0 : i32
    return %c0_i32, %c0_i32_0 : i32, i32
  }
  func.func @transform_3(%arg0: i32, %arg1: i32, %arg2: memref<1xi32, #tpu.memory_space<smem>>) -> (i32, i32, i32) {
    %c0_i32 = arith.constant 0 : i32
    %c0_i32_0 = arith.constant 0 : i32
    return %arg0, %arg1, %c0_i32 : i32, i32, i32
  }
}

</mosaic_0001>

<llo_original>
// kernel: tpu_custom_call.1
$region0: #{tpu_custom_call.1}
  #allocation0 [shape = 'u32[]', space=smem, size = 0x4, offset = 0x4, fixed_abs, tag = 'smem constant byte address 0x4 - core index']
  #allocation1 [shape = 'u32[144,128]{1,0:T(1,128)}', space=vmem, size = 0x12000, scoped, tag = 'internal scratch']
  #allocation2 [shape = 'f32[2,16,16]{2,1,0:T(8,128)}', space=vmem, size = 0x4000, scoped, tag = 'scratch operand']
  #allocation3 [shape = 's32[2]{0}', space=sflag, size = 0x8, scoped, tag = 'scratch operand']
  #allocation4 [shape = 's32[1]{0}', space=sflag, size = 0x4, scoped, tag = 'scoped memory for tpu_custom_call.1']
  #allocation5 [shape = 's32[1]{0:T(128)S(6)}', space=smem, size = 0x200, scoped, tag = 'prefetched SMEM operand 0']
  #allocation10 [shape = 's32[]', space=sflag, size = 0x4, offset = 0, fixed_abs, tag = 'sflag constant byte address 0x0 - dummy sync flag']
  #allocation11 [shape = 's32[]', space=sflag, size = 0x4, offset = 0, fixed_abs, tag = 'sflag constant byte address 0x0 - dummy sync flag']
  #allocation12 [shape = 'u32[]', space=smem, size = 0x4, offset = 0x44, fixed_abs, tag = 'smem constant byte address 0x44 - assertion arg 0']
  #allocation13 [shape = 'u32[]', space=smem, size = 0x4, offset = 0x48, fixed_abs, tag = 'smem constant byte address 0x48 - assertion arg 1']
  #allocation14 [shape = 's32[]', space=sflag, size = 0x4, offset = 0, fixed_abs, tag = 'sflag constant byte address 0x0 - dummy sync flag']
  #allocation15 [shape = 's32[]', space=sflag, size = 0x4, offset = 0, fixed_abs, tag = 'sflag constant byte address 0x0 - dummy sync flag']
  %s0 = inlined_call_operand.<no memory space> [shape: s32[1], index: 0, kind: input, shape index: {}]
  %s1 = inlined_call_operand.hbm [shape: f32[8,16,16], index: 1, kind: input, shape index: {}]
  %s2 = inlined_call_operand.hbm [shape: bf16[1,8,16], index: 2, kind: input, shape index: {}]
  %s3 = inlined_call_operand.vmem [shape: bf16[16,128], index: 3, kind: input, shape index: {}]
  %s4 = inlined_call_operand.hbm [shape: f32[8,8,128], index: 4, kind: output, shape index: {}]
  %s5 = sld [smem:[#allocation0]]
  $region61: #{tpu_custom_call.1} parent=0
    _
  %s7 = ssub.s32 1, %s5
  %s8 = scalar_select 0, %s7, %s5
  %9 = sst [smem:[#allocation5]] %s0
  $region1: #{tpu_custom_call.1} parent=0
    #allocation6 [shape = 'u8[2048]{0}', space=vmem, size = 0x800, scoped, tag = 'input window, operand 2, single buffered']
    #allocation7 [shape = 's32[2]{0}', space=sflag, size = 0x8, scoped, tag = 'scoped memory for tpu_custom_call.1']
    #allocation8 [shape = 's32[2]{0}', space=sflag, size = 0x8, scoped, tag = 'scoped memory for tpu_custom_call.1']
    #allocation9 [shape = 'u8[8192]{0}', space=vmem, size = 0x2000, scoped, tag = 'output window, operand 0']
    %10 = vsyncpa [#allocation7], 0
    %11 = vsyncpa [#allocation8], 0
    %s12 = scalar_lea.sflag [#allocation8], 1
    %13 = vsyncpa %s12, 0
    loop: start=0, step=1, limit=10
    $region2: #{tpu_custom_call.1} parent=1 // loop_pre_header
      _
    $region3: #{tpu_custom_call.1} parent=1 // loop_header
      %s15 = sphi 0, %s19
      %p16 = scmp.ge.s32.totalorder %s15, 10
      %s22 = sphi 0, %s34
      %s23 = sphi 0, %s30
      %s24 = sphi 0, %s22
      %s25 = sphi 0, %s23
      %s26 = sphi 0, %s24
      %s27 = sphi 0, %s25
      %s37 = sphi 0, %s39
      %s40 = sphi 0, %s37
      %s41 = sphi 0, %s40
      %s57 = sphi 0, %s41
      %s61 = sphi 0, %s61
      %s63 = sphi 0, %s61
      %s64 = sphi 0, %s63
      %s78 = sphi 0, %s64
      %s86 = sphi 0, %s88
      %s89 = sphi 0, %s86
      %s90 = sphi 0, %s89
      %s106 = sphi 0, %s90
    $region4: #{tpu_custom_call.1} parent=1 // loop_header_branch
      %18 = sbr.rel (%p16) target = $region8
    $region5: #{tpu_custom_call.1} parent=1 // loop_body
      %s20 = ssub.s32 %s15, 1
      %s21 = ssub.s32 %s15, 2
      %s28 = sadd.s32 1, %s23
      %p29 = scmp.ge.s32.totalorder %s28, 1
      %s30 = scalar_select %p29, 0, %s28
      %s31 = sadd.s32 1, %s22
      %s32 = scalar_select %p29, %s31, %s22
      %p33 = scmp.ge.s32.totalorder %s32, 8
      %s34 = scalar_select %p33, 0, %s32
      %s35 = ssub.s32 %s23, %s30
      %p36 = scmp.eq.s32.totalorder %s35, 0
      %s38 = sadd.s32 %s37, 1
      %s39 = scalar_select %p36, %s37, %s38
      %p42 = pneg %p36
      %p43 = scmp.eq.s32.totalorder %s15, 7
      %p44 = por %p42, %p43
      %p45 = scmp.ne.s32.totalorder %s37, %s40
      %p46 = scmp.eq.s32.totalorder %s15, 0
      %p47 = por %p45, %p46
      %p48 = scmp.ne.s32.totalorder %s37, %s40
      %p49 = scmp.eq.s32.totalorder %s20, 7
      %p50 = por %p48, %p49
      %p51 = scmp.ne.s32.totalorder %s40, %s41
      %p52 = scmp.eq.s32.totalorder %s20, 0
      %p53 = por %p51, %p52
      %p54 = scmp.ne.s32.totalorder %s40, %s41
      %p55 = scmp.eq.s32.totalorder %s21, 7
      %p56 = por %p54, %p55
      %p58 = scmp.ne.s32.totalorder %s41, %s57
      %p59 = scmp.eq.s32.totalorder %s21, 0
      %p60 = por %p58, %p59
      %s62 = sadd.s32 %s61, 1
      %p65 = scmp.eq.s32.totalorder %s15, 7
      %p66 = scmp.ne.s32.totalorder %s61, %s63
      %p67 = scmp.eq.s32.totalorder %s15, 0
      %p68 = por %p66, %p67
      %p69 = scmp.ne.s32.totalorder %s61, %s63
      %p70 = scmp.eq.s32.totalorder %s20, 7
      %p71 = por %p69, %p70
      %p72 = scmp.ne.s32.totalorder %s63, %s64
      %p73 = scmp.eq.s32.totalorder %s20, 0
      %p74 = por %p72, %p73
      %p75 = scmp.ne.s32.totalorder %s63, %s64
      %p76 = scmp.eq.s32.totalorder %s21, 7
      %p77 = por %p75, %p76
      %p79 = scmp.ne.s32.totalorder %s64, %s78
      %p80 = scmp.eq.s32.totalorder %s21, 0
      %p81 = por %p79, %p80
      %s82 = ssub.s32 %s22, %s34
      %s83 = ssub.s32 %s23, %s30
      %s84 = sor.u32 %s82, %s83
      %p85 = scmp.eq.s32.totalorder %s84, 0
      %s87 = sadd.s32 %s86, 1
      %s88 = scalar_select %p85, %s86, %s87
      %p91 = pneg %p85
      %p92 = scmp.eq.s32.totalorder %s15, 7
      %p93 = por %p91, %p92
      %p94 = scmp.ne.s32.totalorder %s86, %s89
      %p95 = scmp.eq.s32.totalorder %s15, 0
      %p96 = por %p94, %p95
      %p97 = scmp.ne.s32.totalorder %s86, %s89
      %p98 = scmp.eq.s32.totalorder %s20, 7
      %p99 = por %p97, %p98
      %p100 = scmp.ne.s32.totalorder %s89, %s90
      %p101 = scmp.eq.s32.totalorder %s20, 0
      %p102 = por %p100, %p101
      %p103 = scmp.ne.s32.totalorder %s89, %s90
      %p104 = scmp.eq.s32.totalorder %s21, 7
      %p105 = por %p103, %p104
      %p107 = scmp.ne.s32.totalorder %s90, %s106
      %p108 = scmp.eq.s32.totalorder %s21, 0
      %p109 = por %p107, %p108
      %p110 = scmp.le.s32.totalorder 1, %s15
      %p111 = scmp.lt.s32.totalorder %s15, 9
      %p112 = pnand %p110, %p111
      %p113 = pneg %p112
      // Predicated region
      $region9: #{tpu_custom_call.1} parent=5 // pred_check
        _
      $region10: #{tpu_custom_call.1} parent=5 // pred_check_branch
        %115 = sbr.rel (%p112) target = $region12
      $region11: #{tpu_custom_call.1} parent=5 // pred_region
        %s116 = ssub.s32 %s15, 1
        // Predicated region
        $region13: #{tpu_custom_call.1} parent=11 // pred_check
          %p117 = pneg %p53
        $region14: #{tpu_custom_call.1} parent=11 // pred_check_branch
          %119 = sbr.rel (%p117) target = $region16
        $region15: #{tpu_custom_call.1} parent=11 // pred_region
          %s121 = ssub.s32 64, 64
          %122 = vsyncadd [#allocation7], %s121
          %s123 = smul.addr %s25, 64
          %s124 = scalar_lea.hbm %s2, %s123
          %s126 = sshll.u32 [#allocation6], 4
          %s127 = int_to_ptr.vmem [resolvable:$true] %s126
          %129 = dma.hbm_to_vmem [thread:$0]  %s124, 64, %s127, [#allocation7]
        $region16: #{tpu_custom_call.1} parent=11 // pred_fallthru
          _
        // Predicated region
        $region17: #{tpu_custom_call.1} parent=11 // pred_check
          %p130 = pneg %p74
        $region18: #{tpu_custom_call.1} parent=11 // pred_check_branch
          %132 = sbr.rel (%p130) target = $region20
        $region19: #{tpu_custom_call.1} parent=11 // pred_region
          _
        $region20: #{tpu_custom_call.1} parent=11 // pred_fallthru
          _
      $region12: #{tpu_custom_call.1} parent=5 // pred_fallthru
        _
      %p133 = scmp.lt.s32.totalorder %s15, 8
      // Predicated region
      $region21: #{tpu_custom_call.1} parent=5 // pred_check
        %p134 = pneg %p133
      $region22: #{tpu_custom_call.1} parent=5 // pred_check_branch
        %136 = sbr.rel (%p134) target = $region24
      $region23: #{tpu_custom_call.1} parent=5 // pred_region
        _
      $region24: #{tpu_custom_call.1} parent=5 // pred_fallthru
        _
      %p137 = scmp.le.s32.totalorder 1, %s15
      %p138 = scmp.lt.s32.totalorder %s15, 9
      %p139 = pnand %p137, %p138
      %p140 = pneg %p139
      // Predicated region
      $region25: #{tpu_custom_call.1} parent=5 // pred_check
        _
      $region26: #{tpu_custom_call.1} parent=5 // pred_check_branch
        %142 = sbr.rel (%p139) target = $region28
      $region27: #{tpu_custom_call.1} parent=5 // pred_region
        %s143 = ssub.s32 %s15, 1
        // Predicated region
        $region29: #{tpu_custom_call.1} parent=27 // pred_check
          %p144 = pneg %p53
        $region30: #{tpu_custom_call.1} parent=27 // pred_check_branch
          %146 = sbr.rel (%p144) target = $region32
        $region31: #{tpu_custom_call.1} parent=27 // pred_region
          %147 = dma.done [#allocation7], 64
        $region32: #{tpu_custom_call.1} parent=27 // pred_fallthru
          _
        %p148 = pneg %p53
        %p149 = pneg %p50
        %p150 = pneg %p74
        %p151 = pneg %p71
        %p152 = pneg %p102
        %p153 = pneg %p99
        %s154 = sand.u32 %s89, 1
        %s155 = scalar_lea.sflag [#allocation8], %s154
        %s156 = sand.u32 %s89, 1
        %s157 = smul.addr %s156, 8
        %s158 = scalar_lea.vmem [#allocation9], %s157
        %p160 = scmp.lt.s32.totalorder %s25, 0
        %s161 = ssub.s32 0, %s25
        %s162 = scalar_select %p160, %s161, %s25
        %s163 = sand.u32 %s162, 1
        %s164 = ssub.s32 0, %s163
        %s165 = scalar_select %p160, %s164, %s163
        %p166 = scmp.ne.s32.totalorder %s165, 0
        %p167 = scmp.lt.s32.totalorder %s165, 0
        %p168 = pnand %p167, %p166
        %p169 = pneg %p168
        %s170 = sadd.s32 %s165, 2
        %s171 = scalar_select %p169, %s170, %s165
        %p172 = scmp.eq.s32.totalorder %s25, 0
        // Predicated region
        $region33: #{tpu_custom_call.1} parent=27 // pred_check
          %p173 = pneg %p172
        $region34: #{tpu_custom_call.1} parent=27 // pred_check_branch
          %175 = sbr.rel (%p173) target = $region36
        $region35: #{tpu_custom_call.1} parent=27 // pred_region
          %s176 = sld [smem:[#allocation5 + %s25]]
          %s177 = smul.u32 %s24, 16
          %s178 = sadd.s32 %s176, %s177
          %s179 = smul.addr %s178, 16
          %s180 = scalar_lea.hbm %s1, %s179
          %s181 = smul.u32 %s171, 16
          %s182 = scalar_lea.vmem [#allocation2], %s181
          %s183 = scalar_lea.sflag [#allocation3], %s171
          // Predicated region
          $region37: #{tpu_custom_call.1} parent=35 // pred_check
            _
          $region38: #{tpu_custom_call.1} parent=35 // pred_check_branch
            %185 = sbr.rel target = $region40
          $region39: #{tpu_custom_call.1} parent=35 // pred_region
            %186 = sst [smem:[#allocation12]] [#allocation11]
            %187 = sst [smem:[#allocation13]] [#allocation10]
          $region40: #{tpu_custom_call.1} parent=35 // pred_fallthru
            _
          %189 = shalt.err (0)
          %s191 = sshll.u32 %s182, 4
          %s192 = int_to_ptr.vmem [resolvable:$true] %s191
          %194 = dma.hbm_to_vmem [thread:$0]  %s180, 256, %s192, %s183
        $region36: #{tpu_custom_call.1} parent=27 // pred_fallthru
          _
        %s195 = sadd.s32 %s25, 1
        %p196 = scmp.lt.s32.totalorder %s195, 1
        // Predicated region
        $region41: #{tpu_custom_call.1} parent=27 // pred_check
          %p197 = pneg %p196
        $region42: #{tpu_custom_call.1} parent=27 // pred_check_branch
          %199 = sbr.rel (%p197) target = $region44
        $region43: #{tpu_custom_call.1} parent=27 // pred_region
          %s200 = ssub.s32 1, %s171
          %s201 = sld [smem:[#allocation5 + %s195]]
          %s202 = smul.u32 %s24, 16
          %s203 = sadd.s32 %s201, %s202
          %s204 = smul.addr %s203, 16
          %s205 = scalar_lea.hbm %s1, %s204
          %s206 = smul.u32 %s200, 16
          %s207 = scalar_lea.vmem [#allocation2], %s206
          %s208 = scalar_lea.sflag [#allocation3], %s200
          // Predicated region
          $region45: #{tpu_custom_call.1} parent=43 // pred_check
            _
          $region46: #{tpu_custom_call.1} parent=43 // pred_check_branch
            %210 = sbr.rel target = $region48
          $region47: #{tpu_custom_call.1} parent=43 // pred_region
            %211 = sst [smem:[#allocation12]] [#allocation15]
            %212 = sst [smem:[#allocation13]] [#allocation14]
          $region48: #{tpu_custom_call.1} parent=43 // pred_fallthru
            _
          %214 = shalt.err (0)
          %s216 = sshll.u32 %s207, 4
          %s217 = int_to_ptr.vmem [resolvable:$true] %s216
          %219 = dma.hbm_to_vmem [thread:$0]  %s205, 256, %s217, %s208
        $region44: #{tpu_custom_call.1} parent=27 // pred_fallthru
          _
        %s220 = sld [smem:[#allocation5 + %s25]]
        %s221 = scalar_lea.sflag [#allocation3], %s171
        %s222 = smul.u32 16, 1
        %s223 = sshll.u32 %s222, 4
        %224 = dma.done %s221, %s223
        %s225 = smul.u32 %s171, 16
        %s226 = scalar_lea.vmem [#allocation2], %s225
        %v227 = vld [vmem:[%s226] sm:$0xff]
        %v228 = vld [vmem:[%s226 + $0x8] sm:$0xff]
        %v229 = vpack.c.bf16 %v228, %v227
        %v230 = vld [vmem:[#allocation6] sm:$0xf]
        %vm231 = vcmask 130048
        %v233 = vsel %vm231, %v230, 0
        %235 = vmatprep.subr.bf16.mxu0 0
        %236 = vmatpush1.bf16.msra.mxu0 %v229
        %237 = vmatprep.subr.bf16.mxu0 0
        %238 = vmatpush1.bf16.msra.mxu0 0
        %239 = vmatprep.subr.bf16.mxu0 0
        %240 = vmatpush1.bf16.msra.mxu0 0
        %241 = vmatprep.subr.bf16.mxu0 0
        %242 = vmatpush1.bf16.msra.mxu0 0
        %243 = vmatprep.subr.bf16.mxu0 0
        %244 = vmatpush1.bf16.msra.mxu0 0
        %245 = vmatprep.subr.bf16.mxu0 0
        %246 = vmatpush1.bf16.msra.mxu0 0
        %247 = vmatprep.subr.bf16.mxu0 0
        %248 = vmatpush1.bf16.msra.mxu0 0
        %249 = vmatprep.subr.bf16.mxu0 0
        %250 = vmatpush1.bf16.msra.mxu0 0
        %251 = vmatprep.subr.bf16.mxu0 0
        %252 = vmatpush1.bf16.msra.mxu0 0
        %253 = vmatprep.subr.bf16.mxu0 0
        %254 = vmatpush1.bf16.msra.mxu0 0
        %255 = vmatprep.subr.bf16.mxu0 0
        %256 = vmatpush1.bf16.msra.mxu0 0
        %257 = vmatprep.subr.bf16.mxu0 0
        %258 = vmatpush1.bf16.msra.mxu0 0
        %259 = vmatprep.subr.bf16.mxu0 0
        %260 = vmatpush1.bf16.msra.mxu0 0
        %261 = vmatprep.subr.bf16.mxu0 0
        %262 = vmatpush1.bf16.msra.mxu0 0
        %263 = vmatprep.subr.bf16.mxu0 0
        %264 = vmatpush1.bf16.msra.mxu0 0
        %265 = vmatprep.subr.bf16.mxu0 0
        %266 = vmatpush1.bf16.msra.mxu0 0
        %267 = vmatprep.mubr.bf16.mxu0 0
        %268 = vmatmul.mubr.bf16.gmra.mrb[0].mxu0 %v233
        %v269 = vpop.f32.mrb[0].mxu0
        %v270 = vadd.f32 0.0, %v269
        %v271 = vpop.f32.mrb[0].mxu0
        %v272 = vpop.f32.mrb[0].mxu0
        %v273 = vpop.f32.mrb[0].mxu0
        %274 = vdwg.mxu0
        %v275 = vpack.c.bf16 %v270, %v270
        %v276 = vld [vmem:[%s3] sm:$0xf]
        %v277 = vld [vmem:[%s3 + $0x4] sm:$0xf]
        %v280 = vunpack.c.l.b16 %v276
        %v281 = vunpack.c.l.b16 %v277
        %v282 = vpack.c.b16 %v281, %v280
        %v285 = vsel %vm231, %v275, 0
        %287 = vmatprep.subr.bf16.mxu0 0
        %288 = vmatpush1.bf16.msra.mxu0 %v282
        %289 = vmatprep.subr.bf16.mxu0 0
        %290 = vmatpush1.bf16.msra.mxu0 0
        %291 = vmatprep.subr.bf16.mxu0 0
        %292 = vmatpush1.bf16.msra.mxu0 0
        %293 = vmatprep.subr.bf16.mxu0 0
        %294 = vmatpush1.bf16.msra.mxu0 0
        %295 = vmatprep.subr.bf16.mxu0 0
        %296 = vmatpush1.bf16.msra.mxu0 0
        %297 = vmatprep.subr.bf16.mxu0 0
        %298 = vmatpush1.bf16.msra.mxu0 0
        %299 = vmatprep.subr.bf16.mxu0 0
        %300 = vmatpush1.bf16.msra.mxu0 0
        %301 = vmatprep.subr.bf16.mxu0 0
        %302 = vmatpush1.bf16.msra.mxu0 0
        %303 = vmatprep.subr.bf16.mxu0 0
        %304 = vmatpush1.bf16.msra.mxu0 0
        %305 = vmatprep.subr.bf16.mxu0 0
        %306 = vmatpush1.bf16.msra.mxu0 0
        %307 = vmatprep.subr.bf16.mxu0 0
        %308 = vmatpush1.bf16.msra.mxu0 0
        %309 = vmatprep.subr.bf16.mxu0 0
        %310 = vmatpush1.bf16.msra.mxu0 0
        %311 = vmatprep.subr.bf16.mxu0 0
        %312 = vmatpush1.bf16.msra.mxu0 0
        %313 = vmatprep.subr.bf16.mxu0 0
        %314 = vmatpush1.bf16.msra.mxu0 0
        %315 = vmatprep.subr.bf16.mxu0 0
        %316 = vmatpush1.bf16.msra.mxu0 0
        %317 = vmatprep.subr.bf16.mxu0 0
        %318 = vmatpush1.bf16.msra.mxu0 0
        %319 = vmatprep.mubr.bf16.mxu0 0
        %320 = vmatmul.mubr.bf16.gmra.mrb[0].mxu0 %v285
        %v321 = vpop.f32.mrb[0].mxu0
        %v322 = vadd.f32 0.0, %v321
        %v323 = vpop.f32.mrb[0].mxu0
        %v324 = vpop.f32.mrb[0].mxu0
        %v325 = vpop.f32.mrb[0].mxu0
        %326 = vdwg.mxu0
        %327 = vst [vmem:[%s158] sm:$0xff] %v322
        %s328 = sand.u32 %s89, 1
        %s329 = scalar_lea.sflag [#allocation8], %s328
        %s330 = sand.u32 %s89, 1
        %s331 = smul.addr %s330, 8
        %s332 = scalar_lea.vmem [#allocation9], %s331
        // Predicated region
        $region49: #{tpu_custom_call.1} parent=27 // pred_check
          %p333 = pneg %p99
        $region50: #{tpu_custom_call.1} parent=27 // pred_check_branch
          %335 = sbr.rel (%p333) target = $region52
        $region51: #{tpu_custom_call.1} parent=27 // pred_region
          %s337 = ssub.s32 128, 128
          %338 = vsyncadd %s329, %s337
          %s339 = sadd.s32 %s25, %s24
          %s340 = smul.addr %s339, 128
          %s341 = scalar_lea.hbm %s4, %s340
          %s343 = sshll.u32 %s332, 4
          %s344 = int_to_ptr.vmem [resolvable:$true] %s343
          %346 = dma.vmem_to_hbm [thread:$0]  %s344, 128, %s341, %s329
        $region52: #{tpu_custom_call.1} parent=27 // pred_fallthru
          _
      $region28: #{tpu_custom_call.1} parent=5 // pred_fallthru
        _
      %p347 = scmp.le.s32.totalorder 2, %s15
      // Predicated region
      $region53: #{tpu_custom_call.1} parent=5 // pred_check
        %p348 = pneg %p347
      $region54: #{tpu_custom_call.1} parent=5 // pred_check_branch
        %350 = sbr.rel (%p348) target = $region56
      $region55: #{tpu_custom_call.1} parent=5 // pred_region
        %s351 = ssub.s32 %s15, 2
        // Predicated region
        $region57: #{tpu_custom_call.1} parent=55 // pred_check
          %p352 = pneg %p105
        $region58: #{tpu_custom_call.1} parent=55 // pred_check_branch
          %354 = sbr.rel (%p352) target = $region60
        $region59: #{tpu_custom_call.1} parent=55 // pred_region
          %s355 = sand.u32 %s90, 1
          %s356 = scalar_lea.sflag [#allocation8], %s355
          %s357 = sand.u32 %s90, 1
          %s358 = smul.addr %s357, 8
          %s359 = scalar_lea.vmem [#allocation9], %s358
          %360 = dma.done %s356, 128
        $region60: #{tpu_custom_call.1} parent=55 // pred_fallthru
          _
      $region56: #{tpu_custom_call.1} parent=5 // pred_fallthru
        _
    $region6: #{tpu_custom_call.1} parent=1 // loop_footer
      %s19 = sadd.s32 1, %s15
    $region7: #{tpu_custom_call.1} parent=1 // loop_footer_branch
      %14 = sbr.rel target = $region3
    $region8: #{tpu_custom_call.1} parent=1 // loop_exit
      _
    %361 = vsyncpa [#allocation7], 1
    %s362 = scalar_lea.sflag [#allocation7], 1
    %363 = vsyncpa %s362, 1
    %364 = vsyncpa [#allocation8], 1
    %s365 = scalar_lea.sflag [#allocation8], 1
    %366 = vsyncpa %s365, 1
  %367 = vsyncmov [#allocation3]
  %s368 = vpop.sfrf %367
  %p369 = scmp.eq.s32.totalorder %s368, 0
  %p370 = pneg %p369
  %372 = shalt.err (%p370)
  %s373 = scalar_lea.sflag [#allocation3], 1
  %374 = vsyncmov %s373
  %s375 = vpop.sfrf %374
  %p376 = scmp.eq.s32.totalorder %s375, 0
  %p377 = pneg %p376
  %379 = shalt.err (%p377)

// kernel: tpu_custom_call.1
$region0: #{tpu_custom_call.1}
  #allocation0 [shape = 'u32[]', space=smem, size = 0x4, offset = 0x4, fixed_abs, tag = 'smem constant byte address 0x4 - core index']
  #allocation1 [shape = 'u32[144,128]{1,0:T(1,128)}', space=vmem, size = 0x12000, scoped, tag = 'internal scratch']
  #allocation2 [shape = 'f32[2,16,16]{2,1,0:T(8,128)}', space=vmem, size = 0x4000, scoped, tag = 'scratch operand']
  #allocation3 [shape = 's32[2]{0}', space=sflag, size = 0x8, scoped, tag = 'scratch operand']
  #allocation4 [shape = 's32[1]{0}', space=sflag, size = 0x4, scoped, tag = 'scoped memory for tpu_custom_call.1']
  #allocation5 [shape = 's32[1]{0:T(128)S(6)}', space=smem, size = 0x200, scoped, tag = 'prefetched SMEM operand 0']
  #allocation10 [shape = 's32[]', space=sflag, size = 0x4, offset = 0, fixed_abs, tag = 'sflag constant byte address 0x0 - dummy sync flag']
  #allocation11 [shape = 's32[]', space=sflag, size = 0x4, offset = 0, fixed_abs, tag = 'sflag constant byte address 0x0 - dummy sync flag']
  #allocation12 [shape = 'u32[]', space=smem, size = 0x4, offset = 0x44, fixed_abs, tag = 'smem constant byte address 0x44 - assertion arg 0']
  #allocation13 [shape = 'u32[]', space=smem, size = 0x4, offset = 0x48, fixed_abs, tag = 'smem constant byte address 0x48 - assertion arg 1']
  #allocation14 [shape = 's32[]', space=sflag, size = 0x4, offset = 0, fixed_abs, tag = 'sflag constant byte address 0x0 - dummy sync flag']
  #allocation15 [shape = 's32[]', space=sflag, size = 0x4, offset = 0, fixed_abs, tag = 'sflag constant byte address 0x0 - dummy sync flag']
  %s0 = inlined_call_operand.<no memory space> [shape: s32[1], index: 0, kind: input, shape index: {}]
  %s1 = inlined_call_operand.hbm [shape: f32[8,16,16], index: 1, kind: input, shape index: {}]
  %s2 = inlined_call_operand.hbm [shape: bf16[1,8,16], index: 2, kind: input, shape index: {}]
  %s3 = inlined_call_operand.vmem [shape: bf16[16,128], index: 3, kind: input, shape index: {}]
  %s4 = inlined_call_operand.hbm [shape: f32[8,8,128], index: 4, kind: output, shape index: {}]
  %s5 = sld [smem:[#allocation0]]
  $region61: #{tpu_custom_call.1} parent=0
    _
  %s7 = ssub.s32 1, %s5
  %s8 = scalar_select 0, %s7, %s5
  %9 = sst [smem:[#allocation5]] %s0
  $region1: #{tpu_custom_call.1} parent=0
    #allocation6 [shape = 'u8[2048]{0}', space=vmem, size = 0x800, scoped, tag = 'input window, operand 2, single buffered']
    #allocation7 [shape = 's32[2]{0}', space=sflag, size = 0x8, scoped, tag = 'scoped memory for tpu_custom_call.1']
    #allocation8 [shape = 's32[2]{0}', space=sflag, size = 0x8, scoped, tag = 'scoped memory for tpu_custom_call.1']
    #allocation9 [shape = 'u8[8192]{0}', space=vmem, size = 0x2000, scoped, tag = 'output window, operand 0']
    %10 = vsyncpa [#allocation7], 0
    %11 = vsyncpa [#allocation8], 0
    %s12 = scalar_lea.sflag [#allocation8], 1
    %13 = vsyncpa %s12, 0
    loop: start=0, step=1, limit=10
    $region2: #{tpu_custom_call.1} parent=1 // loop_pre_header
      _
    $region3: #{tpu_custom_call.1} parent=1 // loop_header
      %s15 = sphi 0, %s19
      %p16 = scmp.ge.s32.totalorder %s15, 10
      %s22 = sphi 0, %s34
      %s23 = sphi 0, %s30
      %s24 = sphi 0, %s22
      %s25 = sphi 0, %s23
      %s26 = sphi 0, %s24
      %s27 = sphi 0, %s25
      %s37 = sphi 0, %s39
      %s40 = sphi 0, %s37
      %s41 = sphi 0, %s40
      %s57 = sphi 0, %s41
      %s61 = sphi 0, %s61
      %s63 = sphi 0, %s61
      %s64 = sphi 0, %s63
      %s78 = sphi 0, %s64
      %s86 = sphi 0, %s88
      %s89 = sphi 0, %s86
      %s90 = sphi 0, %s89
      %s106 = sphi 0, %s90
    $region4: #{tpu_custom_call.1} parent=1 // loop_header_branch
      %18 = sbr.rel (%p16) target = $region8
    $region5: #{tpu_custom_call.1} parent=1 // loop_body
      %s20 = ssub.s32 %s15, 1
      %s21 = ssub.s32 %s15, 2
      %s28 = sadd.s32 1, %s23
      %p29 = scmp.ge.s32.totalorder %s28, 1
      %s30 = scalar_select %p29, 0, %s28
      %s31 = sadd.s32 1, %s22
      %s32 = scalar_select %p29, %s31, %s22
      %p33 = scmp.ge.s32.totalorder %s32, 8
      %s34 = scalar_select %p33, 0, %s32
      %s35 = ssub.s32 %s23, %s30
      %p36 = scmp.eq.s32.totalorder %s35, 0
      %s38 = sadd.s32 %s37, 1
      %s39 = scalar_select %p36, %s37, %s38
      %p42 = pneg %p36
      %p43 = scmp.eq.s32.totalorder %s15, 7
      %p44 = por %p42, %p43
      %p45 = scmp.ne.s32.totalorder %s37, %s40
      %p46 = scmp.eq.s32.totalorder %s15, 0
      %p47 = por %p45, %p46
      %p48 = scmp.ne.s32.totalorder %s37, %s40
      %p49 = scmp.eq.s32.totalorder %s20, 7
      %p50 = por %p48, %p49
      %p51 = scmp.ne.s32.totalorder %s40, %s41
      %p52 = scmp.eq.s32.totalorder %s20, 0
      %p53 = por %p51, %p52
      %p54 = scmp.ne.s32.totalorder %s40, %s41
      %p55 = scmp.eq.s32.totalorder %s21, 7
      %p56 = por %p54, %p55
      %p58 = scmp.ne.s32.totalorder %s41, %s57
      %p59 = scmp.eq.s32.totalorder %s21, 0
      %p60 = por %p58, %p59
      %s62 = sadd.s32 %s61, 1
      %p65 = scmp.eq.s32.totalorder %s15, 7
      %p66 = scmp.ne.s32.totalorder %s61, %s63
      %p67 = scmp.eq.s32.totalorder %s15, 0
      %p68 = por %p66, %p67
      %p69 = scmp.ne.s32.totalorder %s61, %s63
      %p70 = scmp.eq.s32.totalorder %s20, 7
      %p71 = por %p69, %p70
      %p72 = scmp.ne.s32.totalorder %s63, %s64
      %p73 = scmp.eq.s32.totalorder %s20, 0
      %p74 = por %p72, %p73
      %p75 = scmp.ne.s32.totalorder %s63, %s64
      %p76 = scmp.eq.s32.totalorder %s21, 7
      %p77 = por %p75, %p76
      %p79 = scmp.ne.s32.totalorder %s64, %s78
      %p80 = scmp.eq.s32.totalorder %s21, 0
      %p81 = por %p79, %p80
      %s82 = ssub.s32 %s22, %s34
      %s83 = ssub.s32 %s23, %s30
      %s84 = sor.u32 %s82, %s83
      %p85 = scmp.eq.s32.totalorder %s84, 0
      %s87 = sadd.s32 %s86, 1
      %s88 = scalar_select %p85, %s86, %s87
      %p91 = pneg %p85
      %p92 = scmp.eq.s32.totalorder %s15, 7
      %p93 = por %p91, %p92
      %p94 = scmp.ne.s32.totalorder %s86, %s89
      %p95 = scmp.eq.s32.totalorder %s15, 0
      %p96 = por %p94, %p95
      %p97 = scmp.ne.s32.totalorder %s86, %s89
      %p98 = scmp.eq.s32.totalorder %s20, 7
      %p99 = por %p97, %p98
      %p100 = scmp.ne.s32.totalorder %s89, %s90
      %p101 = scmp.eq.s32.totalorder %s20, 0
      %p102 = por %p100, %p101
      %p103 = scmp.ne.s32.totalorder %s89, %s90
      %p104 = scmp.eq.s32.totalorder %s21, 7
      %p105 = por %p103, %p104
      %p107 = scmp.ne.s32.totalorder %s90, %s106
      %p108 = scmp.eq.s32.totalorder %s21, 0
      %p109 = por %p107, %p108
      %p110 = scmp.le.s32.totalorder 1, %s15
      %p111 = scmp.lt.s32.totalorder %s15, 9
      %p112 = pnand %p110, %p111
      %p113 = pneg %p112
      // Predicated region
      $region9: #{tpu_custom_call.1} parent=5 // pred_check
        _
      $region10: #{tpu_custom_call.1} parent=5 // pred_check_branch
        %115 = sbr.rel (%p112) target = $region12
      $region11: #{tpu_custom_call.1} parent=5 // pred_region
        %s116 = ssub.s32 %s15, 1
        // Predicated region
        $region13: #{tpu_custom_call.1} parent=11 // pred_check
          %p117 = pneg %p53
        $region14: #{tpu_custom_call.1} parent=11 // pred_check_branch
          %119 = sbr.rel (%p117) target = $region16
        $region15: #{tpu_custom_call.1} parent=11 // pred_region
          %s121 = ssub.s32 64, 64
          %122 = vsyncadd [#allocation7], %s121
          %s123 = smul.addr %s25, 64
          %s124 = scalar_lea.hbm %s2, %s123
          %s126 = sshll.u32 [#allocation6], 4
          %s127 = int_to_ptr.vmem [resolvable:$true] %s126
          %129 = dma.hbm_to_vmem [thread:$0]  %s124, 64, %s127, [#allocation7]
        $region16: #{tpu_custom_call.1} parent=11 // pred_fallthru
          _
        // Predicated region
        $region17: #{tpu_custom_call.1} parent=11 // pred_check
          %p130 = pneg %p74
        $region18: #{tpu_custom_call.1} parent=11 // pred_check_branch
          %132 = sbr.rel (%p130) target = $region20
        $region19: #{tpu_custom_call.1} parent=11 // pred_region
          _
        $region20: #{tpu_custom_call.1} parent=11 // pred_fallthru
          _
      $region12: #{tpu_custom_call.1} parent=5 // pred_fallthru
        _
      %p133 = scmp.lt.s32.totalorder %s15, 8
      // Predicated region
      $region21: #{tpu_custom_call.1} parent=5 // pred_check
        %p134 = pneg %p133
      $region22: #{tpu_custom_call.1} parent=5 // pred_check_branch
        %136 = sbr.rel (%p134) target = $region24
      $region23: #{tpu_custom_call.1} parent=5 // pred_region
        _
      $region24: #{tpu_custom_call.1} parent=5 // pred_fallthru
        _
      %p137 = scmp.le.s32.totalorder 1, %s15
      %p138 = scmp.lt.s32.totalorder %s15, 9
      %p139 = pnand %p137, %p138
      %p140 = pneg %p139
      // Predicated region
      $region25: #{tpu_custom_call.1} parent=5 // pred_check
        _
      $region26: #{tpu_custom_call.1} parent=5 // pred_check_branch
        %142 = sbr.rel (%p139) target = $region28
      $region27: #{tpu_custom_call.1} parent=5 // pred_region
        %s143 = ssub.s32 %s15, 1
        // Predicated region
        $region29: #{tpu_custom_call.1} parent=27 // pred_check
          %p144 = pneg %p53
        $region30: #{tpu_custom_call.1} parent=27 // pred_check_branch
          %146 = sbr.rel (%p144) target = $region32
        $region31: #{tpu_custom_call.1} parent=27 // pred_region
          %147 = dma.done [#allocation7], 64
        $region32: #{tpu_custom_call.1} parent=27 // pred_fallthru
          _
        %p148 = pneg %p53
        %p149 = pneg %p50
        %p150 = pneg %p74
        %p151 = pneg %p71
        %p152 = pneg %p102
        %p153 = pneg %p99
        %s154 = sand.u32 %s89, 1
        %s155 = scalar_lea.sflag [#allocation8], %s154
        %s156 = sand.u32 %s89, 1
        %s157 = smul.addr %s156, 8
        %s158 = scalar_lea.vmem [#allocation9], %s157
        %p160 = scmp.lt.s32.totalorder %s25, 0
        %s161 = ssub.s32 0, %s25
        %s162 = scalar_select %p160, %s161, %s25
        %s163 = sand.u32 %s162, 1
        %s164 = ssub.s32 0, %s163
        %s165 = scalar_select %p160, %s164, %s163
        %p166 = scmp.ne.s32.totalorder %s165, 0
        %p167 = scmp.lt.s32.totalorder %s165, 0
        %p168 = pnand %p167, %p166
        %p169 = pneg %p168
        %s170 = sadd.s32 %s165, 2
        %s171 = scalar_select %p169, %s170, %s165
        %p172 = scmp.eq.s32.totalorder %s25, 0
        // Predicated region
        $region33: #{tpu_custom_call.1} parent=27 // pred_check
          %p173 = pneg %p172
        $region34: #{tpu_custom_call.1} parent=27 // pred_check_branch
          %175 = sbr.rel (%p173) target = $region36
        $region35: #{tpu_custom_call.1} parent=27 // pred_region
          %s176 = sld [smem:[#allocation5 + %s25]]
          %s177 = smul.u32 %s24, 16
          %s178 = sadd.s32 %s176, %s177
          %s179 = smul.addr %s178, 16
          %s180 = scalar_lea.hbm %s1, %s179
          %s181 = smul.u32 %s171, 16
          %s182 = scalar_lea.vmem [#allocation2], %s181
          %s183 = scalar_lea.sflag [#allocation3], %s171
          // Predicated region
          $region37: #{tpu_custom_call.1} parent=35 // pred_check
            _
          $region38: #{tpu_custom_call.1} parent=35 // pred_check_branch
            %185 = sbr.rel target = $region40
          $region39: #{tpu_custom_call.1} parent=35 // pred_region
            %186 = sst [smem:[#allocation12]] [#allocation11]
            %187 = sst [smem:[#allocation13]] [#allocation10]
          $region40: #{tpu_custom_call.1} parent=35 // pred_fallthru
            _
          %189 = shalt.err (0)
          %s191 = sshll.u32 %s182, 4
          %s192 = int_to_ptr.vmem [resolvable:$true] %s191
          %194 = dma.hbm_to_vmem [thread:$0]  %s180, 256, %s192, %s183
        $region36: #{tpu_custom_call.1} parent=27 // pred_fallthru
          _
        %s195 = sadd.s32 %s25, 1
        %p196 = scmp.lt.s32.totalorder %s195, 1
        // Predicated region
        $region41: #{tpu_custom_call.1} parent=27 // pred_check
          %p197 = pneg %p196
        $region42: #{tpu_custom_call.1} parent=27 // pred_check_branch
          %199 = sbr.rel (%p197) target = $region44
        $region43: #{tpu_custom_call.1} parent=27 // pred_region
          %s200 = ssub.s32 1, %s171
          %s201 = sld [smem:[#allocation5 + %s195]]
          %s202 = smul.u32 %s24, 16
          %s203 = sadd.s32 %s201, %s202
          %s204 = smul.addr %s203, 16
          %s205 = scalar_lea.hbm %s1, %s204
          %s206 = smul.u32 %s200, 16
          %s207 = scalar_lea.vmem [#allocation2], %s206
          %s208 = scalar_lea.sflag [#allocation3], %s200
          // Predicated region
          $region45: #{tpu_custom_call.1} parent=43 // pred_check
            _
          $region46: #{tpu_custom_call.1} parent=43 // pred_check_branch
            %210 = sbr.rel target = $region48
          $region47: #{tpu_custom_call.1} parent=43 // pred_region
            %211 = sst [smem:[#allocation12]] [#allocation15]
            %212 = sst [smem:[#allocation13]] [#allocation14]
          $region48: #{tpu_custom_call.1} parent=43 // pred_fallthru
            _
          %214 = shalt.err (0)
          %s216 = sshll.u32 %s207, 4
          %s217 = int_to_ptr.vmem [resolvable:$true] %s216
          %219 = dma.hbm_to_vmem [thread:$0]  %s205, 256, %s217, %s208
        $region44: #{tpu_custom_call.1} parent=27 // pred_fallthru
          _
        %s220 = sld [smem:[#allocation5 + %s25]]
        %s221 = scalar_lea.sflag [#allocation3], %s171
        %s222 = smul.u32 16, 1
        %s223 = sshll.u32 %s222, 4
        %224 = dma.done %s221, %s223
        %s225 = smul.u32 %s171, 16
        %s226 = scalar_lea.vmem [#allocation2], %s225
        %v227 = vld [vmem:[%s226] sm:$0xff]
        %v228 = vld [vmem:[%s226 + $0x8] sm:$0xff]
        %v229 = vpack.c.bf16 %v228, %v227
        %v230 = vld [vmem:[#allocation6] sm:$0xf]
        %vm231 = vcmask 130048
        %v233 = vsel %vm231, %v230, 0
        %235 = vmatprep.subr.bf16.mxu0 0
        %236 = vmatpush1.bf16.msra.mxu0 %v229
        %237 = vmatprep.subr.bf16.mxu0 0
        %238 = vmatpush1.bf16.msra.mxu0 0
        %239 = vmatprep.subr.bf16.mxu0 0
        %240 = vmatpush1.bf16.msra.mxu0 0
        %241 = vmatprep.subr.bf16.mxu0 0
        %242 = vmatpush1.bf16.msra.mxu0 0
        %243 = vmatprep.subr.bf16.mxu0 0
        %244 = vmatpush1.bf16.msra.mxu0 0
        %245 = vmatprep.subr.bf16.mxu0 0
        %246 = vmatpush1.bf16.msra.mxu0 0
        %247 = vmatprep.subr.bf16.mxu0 0
        %248 = vmatpush1.bf16.msra.mxu0 0
        %249 = vmatprep.subr.bf16.mxu0 0
        %250 = vmatpush1.bf16.msra.mxu0 0
        %251 = vmatprep.subr.bf16.mxu0 0
        %252 = vmatpush1.bf16.msra.mxu0 0
        %253 = vmatprep.subr.bf16.mxu0 0
        %254 = vmatpush1.bf16.msra.mxu0 0
        %255 = vmatprep.subr.bf16.mxu0 0
        %256 = vmatpush1.bf16.msra.mxu0 0
        %257 = vmatprep.subr.bf16.mxu0 0
        %258 = vmatpush1.bf16.msra.mxu0 0
        %259 = vmatprep.subr.bf16.mxu0 0
        %260 = vmatpush1.bf16.msra.mxu0 0
        %261 = vmatprep.subr.bf16.mxu0 0
        %262 = vmatpush1.bf16.msra.mxu0 0
        %263 = vmatprep.subr.bf16.mxu0 0
        %264 = vmatpush1.bf16.msra.mxu0 0
        %265 = vmatprep.subr.bf16.mxu0 0
        %266 = vmatpush1.bf16.msra.mxu0 0
        %267 = vmatprep.mubr.bf16.mxu0 0
        %268 = vmatmul.mubr.bf16.gmra.mrb[0].mxu0 %v233
        %v269 = vpop.f32.mrb[0].mxu0
        %v270 = vadd.f32 0.0, %v269
        %v271 = vpop.f32.mrb[0].mxu0
        %v272 = vpop.f32.mrb[0].mxu0
        %v273 = vpop.f32.mrb[0].mxu0
        %274 = vdwg.mxu0
        %v275 = vpack.c.bf16 %v270, %v270
        %v276 = vld [vmem:[%s3] sm:$0xf]
        %v277 = vld [vmem:[%s3 + $0x4] sm:$0xf]
        %v280 = vunpack.c.l.b16 %v276
        %v281 = vunpack.c.l.b16 %v277
        %v282 = vpack.c.b16 %v281, %v280
        %v285 = vsel %vm231, %v275, 0
        %287 = vmatprep.subr.bf16.mxu0 0
        %288 = vmatpush1.bf16.msra.mxu0 %v282
        %289 = vmatprep.subr.bf16.mxu0 0
        %290 = vmatpush1.bf16.msra.mxu0 0
        %291 = vmatprep.subr.bf16.mxu0 0
        %292 = vmatpush1.bf16.msra.mxu0 0
        %293 = vmatprep.subr.bf16.mxu0 0
        %294 = vmatpush1.bf16.msra.mxu0 0
        %295 = vmatprep.subr.bf16.mxu0 0
        %296 = vmatpush1.bf16.msra.mxu0 0
        %297 = vmatprep.subr.bf16.mxu0 0
        %298 = vmatpush1.bf16.msra.mxu0 0
        %299 = vmatprep.subr.bf16.mxu0 0
        %300 = vmatpush1.bf16.msra.mxu0 0
        %301 = vmatprep.subr.bf16.mxu0 0
        %302 = vmatpush1.bf16.msra.mxu0 0
        %303 = vmatprep.subr.bf16.mxu0 0
        %304 = vmatpush1.bf16.msra.mxu0 0
        %305 = vmatprep.subr.bf16.mxu0 0
        %306 = vmatpush1.bf16.msra.mxu0 0
        %307 = vmatprep.subr.bf16.mxu0 0
        %308 = vmatpush1.bf16.msra.mxu0 0
        %309 = vmatprep.subr.bf16.mxu0 0
        %310 = vmatpush1.bf16.msra.mxu0 0
        %311 = vmatprep.subr.bf16.mxu0 0
        %312 = vmatpush1.bf16.msra.mxu0 0
        %313 = vmatprep.subr.bf16.mxu0 0
        %314 = vmatpush1.bf16.msra.mxu0 0
        %315 = vmatprep.subr.bf16.mxu0 0
        %316 = vmatpush1.bf16.msra.mxu0 0
        %317 = vmatprep.subr.bf16.mxu0 0
        %318 = vmatpush1.bf16.msra.mxu0 0
        %319 = vmatprep.mubr.bf16.mxu0 0
        %320 = vmatmul.mubr.bf16.gmra.mrb[0].mxu0 %v285
        %v321 = vpop.f32.mrb[0].mxu0
        %v322 = vadd.f32 0.0, %v321
        %v323 = vpop.f32.mrb[0].mxu0
        %v324 = vpop.f32.mrb[0].mxu0
        %v325 = vpop.f32.mrb[0].mxu0
        %326 = vdwg.mxu0
        %327 = vst [vmem:[%s158] sm:$0xff] %v322
        %s328 = sand.u32 %s89, 1
        %s329 = scalar_lea.sflag [#allocation8], %s328
        %s330 = sand.u32 %s89, 1
        %s331 = smul.addr %s330, 8
        %s332 = scalar_lea.vmem [#allocation9], %s331
        // Predicated region
        $region49: #{tpu_custom_call.1} parent=27 // pred_check
          %p333 = pneg %p99
        $region50: #{tpu_custom_call.1} parent=27 // pred_check_branch
          %335 = sbr.rel (%p333) target = $region52
        $region51: #{tpu_custom_call.1} parent=27 // pred_region
          %s337 = ssub.s32 128, 128
          %338 = vsyncadd %s329, %s337
          %s339 = sadd.s32 %s25, %s24
          %s340 = smul.addr %s339, 128
          %s341 = scalar_lea.hbm %s4, %s340
          %s343 = sshll.u32 %s332, 4
          %s344 = int_to_ptr.vmem [resolvable:$true] %s343
          %346 = dma.vmem_to_hbm [thread:$0]  %s344, 128, %s341, %s329
        $region52: #{tpu_custom_call.1} parent=27 // pred_fallthru
          _
      $region28: #{tpu_custom_call.1} parent=5 // pred_fallthru
        _
      %p347 = scmp.le.s32.totalorder 2, %s15
      // Predicated region
      $region53: #{tpu_custom_call.1} parent=5 // pred_check
        %p348 = pneg %p347
      $region54: #{tpu_custom_call.1} parent=5 // pred_check_branch
        %350 = sbr.rel (%p348) target = $region56
      $region55: #{tpu_custom_call.1} parent=5 // pred_region
        %s351 = ssub.s32 %s15, 2
        // Predicated region
        $region57: #{tpu_custom_call.1} parent=55 // pred_check
          %p352 = pneg %p105
        $region58: #{tpu_custom_call.1} parent=55 // pred_check_branch
          %354 = sbr.rel (%p352) target = $region60
        $region59: #{tpu_custom_call.1} parent=55 // pred_region
          %s355 = sand.u32 %s90, 1
          %s356 = scalar_lea.sflag [#allocation8], %s355
          %s357 = sand.u32 %s90, 1
          %s358 = smul.addr %s357, 8
          %s359 = scalar_lea.vmem [#allocation9], %s358
          %360 = dma.done %s356, 128
        $region60: #{tpu_custom_call.1} parent=55 // pred_fallthru
          _
      $region56: #{tpu_custom_call.1} parent=5 // pred_fallthru
        _
    $region6: #{tpu_custom_call.1} parent=1 // loop_footer
      %s19 = sadd.s32 1, %s15
    $region7: #{tpu_custom_call.1} parent=1 // loop_footer_branch
      %14 = sbr.rel target = $region3
    $region8: #{tpu_custom_call.1} parent=1 // loop_exit
      _
    %361 = vsyncpa [#allocation7], 1
    %s362 = scalar_lea.sflag [#allocation7], 1
    %363 = vsyncpa %s362, 1
    %364 = vsyncpa [#allocation8], 1
    %s365 = scalar_lea.sflag [#allocation8], 1
    %366 = vsyncpa %s365, 1
  %367 = vsyncmov [#allocation3]
  %s368 = vpop.sfrf %367
  %p369 = scmp.eq.s32.totalorder %s368, 0
  %p370 = pneg %p369
  %372 = shalt.err (%p370)
  %s373 = scalar_lea.sflag [#allocation3], 1
  %374 = vsyncmov %s373
  %s375 = vpop.sfrf %374
  %p376 = scmp.eq.s32.totalorder %s375, 0
  %p377 = pneg %p376
  %379 = shalt.err (%p377)

</llo_original>
